<compile_context>
chip_gen: v7x
topology: tpu7x:2x2x1
jax: 0.10.0
libtpu: 0.0.40
codegen_flags: <defaults>
</compile_context>

<pallas_src>
import math

import jax
import jax.numpy as jnp
from jax.experimental import pallas as pl
from jax.experimental.pallas import tpu as pltpu


# ----- in-kernel lgamma (Lanczos g=7, 9 coefficients; valid for z > 0) -----
_LANCZOS_G = 7.0
_LANCZOS_COEF = (
    0.99999999999980993,
    676.5203681218851,
    -1259.1392167224028,
    771.32342877765313,
    -176.61502916214059,
    12.507343278686905,
    -0.13857109526572012,
    9.9843695780195716e-6,
    1.5056327351493116e-7,
)
_HALF_LOG_2PI = 0.5 * math.log(2.0 * math.pi)


def _lgamma_pos(z):
    """log Gamma(z) for z > 0 (elementwise, VPU/EUP ops only).

    The 8 coef/(z+k-1) partial terms are independent: sum them with a pairwise
    tree so the VPU adds overlap the EUP reciprocal pipeline instead of forming
    an 8-deep serial chain.
    """
    terms = []
    for k in range(1, 9):
        den = z if k == 1 else z + (k - 1.0)
        terms.append(_LANCZOS_COEF[k] / den)
    while len(terms) > 1:
        nxt = [terms[i] + terms[i + 1] for i in range(0, len(terms) - 1, 2)]
        if len(terms) % 2:
            nxt.append(terms[-1])
        terms = nxt
    a = terms[0] + _LANCZOS_COEF[0]
    t = z + (_LANCZOS_G - 0.5)
    return _HALF_LOG_2PI + (z - 0.5) * jnp.log(t) - t + jnp.log(a)


def _mle_loss_kernel(s_ref, x_ref, o_ref):
    # s_ref : (1, 2) SMEM  -> [inv_T, gamma]
    # x_ref : (8, 40) VMEM -> row0 alpha logits, row1 beta logits, rows2-7 target_u^T
    # o_ref : (1, 1) VMEM  -> scalar loss
    inv_T = s_ref[0, 0]
    gamma = s_ref[0, 1]

    x = x_ref[...]                                    # (8, 40): single vld
    e = jnp.exp(x * inv_T)                            # rows 0/1 -> alphas / betas
                                                      # rows 2-7 -> harmless positives

    alphas = e[0:1, :]                                # (1, 40)
    betas = e[1:2, :]                                 # (1, 40)
    a0 = alphas + betas                               # (1, 40)

    # --- terms 1-3: ONE stacked lgamma over the whole tile ------------------
    row = jax.lax.broadcasted_iota(jnp.int32, (8, 40), 0)
    z = jnp.where(row == 2, a0, e)                    # row2 := alphas+betas
    lg = _lgamma_pos(z)                               # single lgamma evaluation
    w = jnp.where(row < 2, 1.0, jnp.where(row == 2, -1.0, 0.0))
    # per-lane: lgamma(alpha) + lgamma(beta) - lgamma(alpha+beta)
    lg_term = jnp.sum(lg * w, axis=0, keepdims=True)  # (1, 40)

    # --- terms 4-5: log(target), log(1-target) via log-sigmoid identities ---
    tu = x[2:8, :]                                    # (6, 40) raw target_u^T
    ts = (1.0 - gamma) * tu + 0.5 * gamma
    u = (jnp.log(ts) - jnp.log(1.0 - ts)) * inv_T     # logit_t / T
    # softplus(-u) = max(-u,0) + log(1 + exp(-|u|))   (numerically stable)
    sp_neg_u = jnp.maximum(-u, 0.0) + jnp.log(1.0 + jnp.exp(-jnp.abs(u)))
    log_t = -sp_neg_u                                 # log sigmoid(u)   = log target
    log_1mt = -u - sp_neg_u                           # log(1-sigmoid(u))= log(1-target)

    slog_t = jnp.sum(log_t, axis=0, keepdims=True)    # (1, 40)  sum over the "6" axis
    slog_1mt = jnp.sum(log_1mt, axis=0, keepdims=True)
    poly = (alphas - 1.0) * slog_t + (betas - 1.0) * slog_1mt   # (1, 40)

    # --- fuse everything into one lane reduction ----------------------------
    # loss = (sum lgamma(a) + sum lgamma(b) - sum lgamma(a0)) / 40
    #        - (sum (a-1)@log(t) + sum (b-1)@log(1-t)) / 240
    combined = lg_term * (1.0 / 40.0) - poly * (1.0 / 240.0)    # (1, 40)
    o_ref[...] = jnp.sum(combined, axis=1, keepdims=True)       # (1, 1)


def mle_loss(output, target_u, T, gamma):
    """output: [8, 10] f32, target_u: [8, 5, 6] f32, T/gamma: python floats."""
    output = output.astype(jnp.float32)
    target_u = target_u.astype(jnp.float32)

    a_logits = output[:, 0:5].reshape(1, 40)
    b_logits = output[:, 5:10].reshape(1, 40)
    tu_t = target_u.reshape(40, 6).T                  # (6, 40)
    x_slab = jnp.concatenate([a_logits, b_logits, tu_t], axis=0)  # (8, 40)

    s_arr = jnp.array([[1.0 / float(T), float(gamma)]], dtype=jnp.float32)

    loss = pl.pallas_call(
        _mle_loss_kernel,
        out_shape=jax.ShapeDtypeStruct((1, 1), jnp.float32),
        in_specs=[
            pl.BlockSpec(memory_space=pltpu.MemorySpace.SMEM),   # [inv_T, gamma]
            pl.BlockSpec(memory_space=pltpu.MemorySpace.VMEM),   # (8,40) slab
        ],
        out_specs=pl.BlockSpec(memory_space=pltpu.MemorySpace.VMEM),
        cost_estimate=pl.CostEstimate(
            flops=12_000,
            transcendentals=5_000,
            bytes_accessed=(8 * 40 + 2 + 1) * 4,
        ),
    )(s_arr, x_slab)
    return loss[0, 0]


if __name__ == "__main__":
    key = jax.random.PRNGKey(0)
    k_out, k_tgt = jax.random.split(key)

    # shapes are dictated by the module: output[:, 0:5]/[:, 5:10], reshape (8,5,6)
    output = jax.random.normal(k_out, (8, 10), dtype=jnp.float32)
    target_u = jax.random.uniform(
        k_tgt, (8, 5, 6), dtype=jnp.float32, minval=0.05, maxval=0.95
    )
    T = 2.0
    gamma = 0.1

    loss = mle_loss(output, target_u, T, gamma)
    jax.block_until_ready(loss)
    print("KERNEL_OK")
</pallas_src>

<mosaic_0001>
module attributes {stable_mosaic.version = 11 : i64} {
  func.func @_mle_loss_kernel(%arg0: memref<1x2xf32, #tpu.memory_space<smem>>, %arg1: memref<8x40xf32, #tpu.memory_space<vmem>>, %arg2: memref<1x1xf32, #tpu.memory_space<vmem>>) attributes {dimension_semantics = [], scalar_prefetch = 0 : i64, scratch_operands = 0 : i64, tpu.core_type = #tpu.core_type<tc>} {
    %c0 = arith.constant 0 : index
    %c0_0 = arith.constant 0 : index
    %0 = memref.load %arg0[%c0, %c0_0] : memref<1x2xf32, #tpu.memory_space<smem>>
    %c0_1 = arith.constant 0 : index
    %c1 = arith.constant 1 : index
    %1 = memref.load %arg0[%c0_1, %c1] : memref<1x2xf32, #tpu.memory_space<smem>>
    %c0_2 = arith.constant 0 : index
    %c0_3 = arith.constant 0 : index
    %2 = vector.load %arg1[%c0_2, %c0_3] : memref<8x40xf32, #tpu.memory_space<vmem>>, vector<8x40xf32>
    %3 = vector.broadcast %0 : f32 to vector<8x40xf32>
    %4 = arith.mulf %2, %3 : vector<8x40xf32>
    %5 = math.exp %4 : vector<8x40xf32>
    %6 = vector.extract_strided_slice %5 {offsets = [0, 0], sizes = [1, 40], strides = [1, 1]} : vector<8x40xf32> to vector<1x40xf32>
    %7 = vector.extract_strided_slice %5 {offsets = [1, 0], sizes = [1, 40], strides = [1, 1]} : vector<8x40xf32> to vector<1x40xf32>
    %8 = arith.addf %6, %7 : vector<1x40xf32>
    %9 = tpu.iota {dimensions = array<i32: 0>} : vector<8x40xi32>
    %c2_i32 = arith.constant 2 : i32
    %10 = vector.broadcast %c2_i32 : i32 to vector<8x40xi32>
    %11 = arith.cmpi eq, %9, %10 : vector<8x40xi32>
    %12 = vector.shape_cast %8 : vector<1x40xf32> to vector<1x40xf32>
    %13 = vector.broadcast %12 : vector<1x40xf32> to vector<8x40xf32>
    %14 = arith.select %11, %13, %5 : vector<8x40xi1>, vector<8x40xf32>
    %cst = arith.constant 676.520386 : f32
    %15 = vector.broadcast %cst : f32 to vector<8x40xf32>
    %16 = arith.divf %15, %14 : vector<8x40xf32>
    %cst_4 = arith.constant 1.000000e+00 : f32
    %17 = vector.broadcast %cst_4 : f32 to vector<8x40xf32>
    %18 = arith.addf %14, %17 : vector<8x40xf32>
    %cst_5 = arith.constant -1259.13916 : f32
    %19 = vector.broadcast %cst_5 : f32 to vector<8x40xf32>
    %20 = arith.divf %19, %18 : vector<8x40xf32>
    %cst_6 = arith.constant 2.000000e+00 : f32
    %21 = vector.broadcast %cst_6 : f32 to vector<8x40xf32>
    %22 = arith.addf %14, %21 : vector<8x40xf32>
    %cst_7 = arith.constant 771.323425 : f32
    %23 = vector.broadcast %cst_7 : f32 to vector<8x40xf32>
    %24 = arith.divf %23, %22 : vector<8x40xf32>
    %cst_8 = arith.constant 3.000000e+00 : f32
    %25 = vector.broadcast %cst_8 : f32 to vector<8x40xf32>
    %26 = arith.addf %14, %25 : vector<8x40xf32>
    %cst_9 = arith.constant -176.615036 : f32
    %27 = vector.broadcast %cst_9 : f32 to vector<8x40xf32>
    %28 = arith.divf %27, %26 : vector<8x40xf32>
    %cst_10 = arith.constant 4.000000e+00 : f32
    %29 = vector.broadcast %cst_10 : f32 to vector<8x40xf32>
    %30 = arith.addf %14, %29 : vector<8x40xf32>
    %cst_11 = arith.constant 12.5073433 : f32
    %31 = vector.broadcast %cst_11 : f32 to vector<8x40xf32>
    %32 = arith.divf %31, %30 : vector<8x40xf32>
    %cst_12 = arith.constant 5.000000e+00 : f32
    %33 = vector.broadcast %cst_12 : f32 to vector<8x40xf32>
    %34 = arith.addf %14, %33 : vector<8x40xf32>
    %cst_13 = arith.constant -0.138571098 : f32
    %35 = vector.broadcast %cst_13 : f32 to vector<8x40xf32>
    %36 = arith.divf %35, %34 : vector<8x40xf32>
    %cst_14 = arith.constant 6.000000e+00 : f32
    %37 = vector.broadcast %cst_14 : f32 to vector<8x40xf32>
    %38 = arith.addf %14, %37 : vector<8x40xf32>
    %cst_15 = arith.constant 9.98436917E-6 : f32
    %39 = vector.broadcast %cst_15 : f32 to vector<8x40xf32>
    %40 = arith.divf %39, %38 : vector<8x40xf32>
    %cst_16 = arith.constant 7.000000e+00 : f32
    %41 = vector.broadcast %cst_16 : f32 to vector<8x40xf32>
    %42 = arith.addf %14, %41 : vector<8x40xf32>
    %cst_17 = arith.constant 1.50563267E-7 : f32
    %43 = vector.broadcast %cst_17 : f32 to vector<8x40xf32>
    %44 = arith.divf %43, %42 : vector<8x40xf32>
    %45 = arith.addf %16, %20 : vector<8x40xf32>
    %46 = arith.addf %24, %28 : vector<8x40xf32>
    %47 = arith.addf %32, %36 : vector<8x40xf32>
    %48 = arith.addf %40, %44 : vector<8x40xf32>
    %49 = arith.addf %45, %46 : vector<8x40xf32>
    %50 = arith.addf %47, %48 : vector<8x40xf32>
    %51 = arith.addf %49, %50 : vector<8x40xf32>
    %cst_18 = arith.constant 1.000000e+00 : f32
    %52 = vector.broadcast %cst_18 : f32 to vector<8x40xf32>
    %53 = arith.addf %51, %52 : vector<8x40xf32>
    %cst_19 = arith.constant 6.500000e+00 : f32
    %54 = vector.broadcast %cst_19 : f32 to vector<8x40xf32>
    %55 = arith.addf %14, %54 : vector<8x40xf32>
    %cst_20 = arith.constant 5.000000e-01 : f32
    %56 = vector.broadcast %cst_20 : f32 to vector<8x40xf32>
    %57 = arith.subf %14, %56 : vector<8x40xf32>
    %58 = math.log %55 : vector<8x40xf32>
    %59 = arith.mulf %57, %58 : vector<8x40xf32>
    %cst_21 = arith.constant 0.918938517 : f32
    %60 = vector.broadcast %cst_21 : f32 to vector<8x40xf32>
    %61 = arith.addf %60, %59 : vector<8x40xf32>
    %62 = arith.subf %61, %55 : vector<8x40xf32>
    %63 = math.log %53 : vector<8x40xf32>
    %64 = arith.addf %62, %63 : vector<8x40xf32>
    %c2_i32_22 = arith.constant 2 : i32
    %65 = vector.broadcast %c2_i32_22 : i32 to vector<8x40xi32>
    %66 = arith.cmpi slt, %9, %65 : vector<8x40xi32>
    %c2_i32_23 = arith.constant 2 : i32
    %67 = vector.broadcast %c2_i32_23 : i32 to vector<8x40xi32>
    %68 = arith.cmpi eq, %9, %67 : vector<8x40xi32>
    %cst_24 = arith.constant -1.000000e+00 : f32
    %cst_25 = arith.constant 0.000000e+00 : f32
    %69 = vector.broadcast %cst_24 : f32 to vector<8x40xf32>
    %70 = vector.broadcast %cst_25 : f32 to vector<8x40xf32>
    %71 = arith.select %68, %69, %70 : vector<8x40xi1>, vector<8x40xf32>
    %cst_26 = arith.constant 1.000000e+00 : f32
    %72 = vector.broadcast %cst_26 : f32 to vector<8x40xf32>
    %73 = arith.select %66, %72, %71 : vector<8x40xi1>, vector<8x40xf32>
    %74 = arith.mulf %64, %73 : vector<8x40xf32>
    %cst_27 = arith.constant dense<0.000000e+00> : vector<40xf32>
    %75 = vector.multi_reduction <add>, %74, %cst_27 [0] : vector<8x40xf32> to vector<40xf32>
    %76 = vector.shape_cast %75 : vector<40xf32> to vector<1x40xf32>
    %77 = vector.extract_strided_slice %2 {offsets = [2, 0], sizes = [6, 40], strides = [1, 1]} : vector<8x40xf32> to vector<6x40xf32>
    %cst_28 = arith.constant 1.000000e+00 : f32
    %78 = arith.subf %cst_28, %1 : f32
    %79 = vector.broadcast %78 : f32 to vector<6x40xf32>
    %80 = arith.mulf %79, %77 : vector<6x40xf32>
    %cst_29 = arith.constant 5.000000e-01 : f32
    %81 = arith.mulf %cst_29, %1 : f32
    %82 = vector.broadcast %81 : f32 to vector<6x40xf32>
    %83 = arith.addf %80, %82 : vector<6x40xf32>
    %84 = math.log %83 : vector<6x40xf32>
    %cst_30 = arith.constant 1.000000e+00 : f32
    %85 = vector.broadcast %cst_30 : f32 to vector<6x40xf32>
    %86 = arith.subf %85, %83 : vector<6x40xf32>
    %87 = math.log %86 : vector<6x40xf32>
    %88 = arith.subf %84, %87 : vector<6x40xf32>
    %89 = vector.broadcast %0 : f32 to vector<6x40xf32>
    %90 = arith.mulf %88, %89 : vector<6x40xf32>
    %cst_31 = arith.constant 0.000000e+00 : f32
    %91 = vector.broadcast %cst_31 : f32 to vector<6x40xf32>
    %92 = arith.subf %91, %90 : vector<6x40xf32>
    %cst_32 = arith.constant 0.000000e+00 : f32
    %93 = vector.broadcast %cst_32 : f32 to vector<6x40xf32>
    %94 = arith.maximumf %92, %93 : vector<6x40xf32>
    %95 = math.absf %90 : vector<6x40xf32>
    %cst_33 = arith.constant 0.000000e+00 : f32
    %96 = vector.broadcast %cst_33 : f32 to vector<6x40xf32>
    %97 = arith.subf %96, %95 : vector<6x40xf32>
    %98 = math.exp %97 : vector<6x40xf32>
    %cst_34 = arith.constant 1.000000e+00 : f32
    %99 = vector.broadcast %cst_34 : f32 to vector<6x40xf32>
    %100 = arith.addf %99, %98 : vector<6x40xf32>
    %101 = math.log %100 : vector<6x40xf32>
    %102 = arith.addf %94, %101 : vector<6x40xf32>
    %cst_35 = arith.constant 0.000000e+00 : f32
    %103 = vector.broadcast %cst_35 : f32 to vector<6x40xf32>
    %104 = arith.subf %103, %102 : vector<6x40xf32>
    %cst_36 = arith.constant 0.000000e+00 : f32
    %105 = vector.broadcast %cst_36 : f32 to vector<6x40xf32>
    %106 = arith.subf %105, %90 : vector<6x40xf32>
    %107 = arith.subf %106, %102 : vector<6x40xf32>
    %cst_37 = arith.constant dense<0.000000e+00> : vector<40xf32>
    %108 = vector.multi_reduction <add>, %104, %cst_37 [0] : vector<6x40xf32> to vector<40xf32>
    %109 = vector.shape_cast %108 : vector<40xf32> to vector<1x40xf32>
    %cst_38 = arith.constant dense<0.000000e+00> : vector<40xf32>
    %110 = vector.multi_reduction <add>, %107, %cst_38 [0] : vector<6x40xf32> to vector<40xf32>
    %111 = vector.shape_cast %110 : vector<40xf32> to vector<1x40xf32>
    %cst_39 = arith.constant 1.000000e+00 : f32
    %112 = vector.broadcast %cst_39 : f32 to vector<1x40xf32>
    %113 = arith.subf %6, %112 : vector<1x40xf32>
    %114 = arith.mulf %113, %109 : vector<1x40xf32>
    %cst_40 = arith.constant 1.000000e+00 : f32
    %115 = vector.broadcast %cst_40 : f32 to vector<1x40xf32>
    %116 = arith.subf %7, %115 : vector<1x40xf32>
    %117 = arith.mulf %116, %111 : vector<1x40xf32>
    %118 = arith.addf %114, %117 : vector<1x40xf32>
    %cst_41 = arith.constant 2.500000e-02 : f32
    %119 = vector.broadcast %cst_41 : f32 to vector<1x40xf32>
    %120 = arith.mulf %76, %119 : vector<1x40xf32>
    %cst_42 = arith.constant 0.00416666688 : f32
    %121 = vector.broadcast %cst_42 : f32 to vector<1x40xf32>
    %122 = arith.mulf %118, %121 : vector<1x40xf32>
    %123 = arith.subf %120, %122 : vector<1x40xf32>
    %cst_43 = arith.constant dense<0.000000e+00> : vector<1xf32>
    %124 = vector.multi_reduction <add>, %123, %cst_43 [1] : vector<1x40xf32> to vector<1xf32>
    %125 = vector.shape_cast %124 : vector<1xf32> to vector<1x1xf32>
    %c0_44 = arith.constant 0 : index
    %c0_45 = arith.constant 0 : index
    %126 = vector.load %arg2[%c0_44, %c0_45] : memref<1x1xf32, #tpu.memory_space<vmem>>, vector<1x1xf32>
    tpu.vector_store %arg2[%c0_44, %c0_45], %125 {strides = array<i32>} : memref<1x1xf32, #tpu.memory_space<vmem>>, vector<1x1xf32>,
    return
  }
}

</mosaic_0001>

<llo_original>
// kernel: tpu_custom_call.1
$region0: #{tpu_custom_call.1}
  #allocation0 [shape = 'u32[]', space=smem, size = 0x4, offset = 0x4, fixed_abs, tag = 'smem constant byte address 0x4 - core index']
  #allocation1 [shape = 'u32[144,128]{1,0:T(1,128)}', space=vmem, size = 0x12000, scoped, tag = 'internal scratch']
  %s0 = inlined_call_operand.hbm [shape: f32[1,2], index: 0, kind: input, shape index: {}]
  %s1 = inlined_call_operand.hbm [shape: f32[8,40], index: 1, kind: input, shape index: {}]
  %s2 = inlined_call_operand.hbm [shape: f32[1,1], index: 2, kind: output, shape index: {}]
  %s3 = sld [smem:[#allocation0]]
  $region26: #{tpu_custom_call.1} parent=0
    _
  %s5 = ssub.s32 1, %s3
  %s6 = scalar_select 0, %s5, %s3
  $region1: #{tpu_custom_call.1} parent=0
    #allocation2 [shape = 'u8[512]{0}', space=smem, size = 0x200, scoped, tag = 'input window, operand 0, single buffered']
    #allocation3 [shape = 's32[1]{0}', space=sflag, size = 0x4, scoped, tag = 'scoped memory for tpu_custom_call.1']
    #allocation4 [shape = 's32[1]{0}', space=sflag, size = 0x4, scoped, tag = 'scoped memory for tpu_custom_call.1']
    #allocation5 [shape = 's32[1]{0}', space=sflag, size = 0x4, scoped, tag = 'scoped memory for tpu_custom_call.1']
    #allocation6 [shape = 'u8[4096]{0}', space=vmem, size = 0x1000, scoped, tag = 'input window, operand 1, single buffered']
    #allocation7 [shape = 'u8[512]{0}', space=vmem, size = 0x400, scoped, tag = 'output window, operand 0, single buffered']
    %7 = vsyncpa [#allocation5], 0
    %8 = vsyncpa [#allocation3], 0
    %9 = vsyncpa [#allocation4], 0
    // Predicated region
    $region2: #{tpu_custom_call.1} parent=1 // pred_check
      _
    $region3: #{tpu_custom_call.1} parent=1 // pred_check_branch
      %11 = sbr.rel (0) target = $region5
    $region4: #{tpu_custom_call.1} parent=1 // pred_region
      %s13 = ssub.s32 16, 16
      %14 = vsyncadd [#allocation5], %s13
      %17 = dma.hbm_to_smem %s0, 16, [#allocation2], [#allocation5]
    $region5: #{tpu_custom_call.1} parent=1 // pred_fallthru
      _
    // Predicated region
    $region6: #{tpu_custom_call.1} parent=1 // pred_check
      _
    $region7: #{tpu_custom_call.1} parent=1 // pred_check_branch
      %19 = sbr.rel (0) target = $region9
    $region8: #{tpu_custom_call.1} parent=1 // pred_region
      %s21 = ssub.s32 128, 128
      %22 = vsyncadd [#allocation3], %s21
      %s24 = sshll.u32 [#allocation6], 4
      %s25 = int_to_ptr.vmem [resolvable:$true] %s24
      %27 = dma.hbm_to_vmem [thread:$0]  %s1, 128, %s25, [#allocation3]
    $region9: #{tpu_custom_call.1} parent=1 // pred_fallthru
      _
    // Predicated region
    $region10: #{tpu_custom_call.1} parent=1 // pred_check
      _
    $region11: #{tpu_custom_call.1} parent=1 // pred_check_branch
      %29 = sbr.rel (0) target = $region13
    $region12: #{tpu_custom_call.1} parent=1 // pred_region
      %30 = dma.done [#allocation5], 16
    $region13: #{tpu_custom_call.1} parent=1 // pred_fallthru
      _
    // Predicated region
    $region14: #{tpu_custom_call.1} parent=1 // pred_check
      _
    $region15: #{tpu_custom_call.1} parent=1 // pred_check_branch
      %32 = sbr.rel (0) target = $region17
    $region16: #{tpu_custom_call.1} parent=1 // pred_region
      %33 = dma.done [#allocation3], 128
    $region17: #{tpu_custom_call.1} parent=1 // pred_fallthru
      _
    %34 = sfence
    %s35 = sld [smem:[#allocation2]]
    %s36 = sld [smem:[#allocation2 + $0x1]]
    %v37 = vld [vmem:[#allocation6] sm:$0xff]
    %v38 = vstv %s35
    %v39 = vmul.f32 %v37, %v38
    %v40 = vmul.f32 %v39, 1.442695
    %v41 = vpow.pop %v40
    %v43 = vrot.slane %v41, 1
    %v45 = vadd.f32 %v41, %v43
    %v46 = vlaneseq
    %v47 = vshrl.u32 %v46, 7
    %vm48 = vcmp.eq.s32.totalorder %v47, 2
    %v49 = vlaneseq
    %v50 = vshrl.u32 %v49, 7
    %v51 = vsub.s32 0, %v50
    %v52 = vrot.slane %v45, %v51
    %v53 = vsel %vm48, %v52, %v41
    %v54 = vrcp.pop %v53
    %v55 = vmul.f32 676.5204, %v54
    %v56 = vadd.f32 %v53, 1.0
    %v57 = vrcp.pop %v56
    %v58 = vmul.f32 -1259.1392, %v57
    %v59 = vadd.f32 %v53, 2.0
    %v60 = vrcp.pop %v59
    %v61 = vmul.f32 771.3234, %v60
    %v62 = vadd.f32 %v53, 3.0
    %v63 = vrcp.pop %v62
    %v64 = vmul.f32 -176.61504, %v63
    %v65 = vadd.f32 %v53, 4.0
    %v66 = vrcp.pop %v65
    %v67 = vmul.f32 12.507343, %v66
    %v68 = vadd.f32 %v53, 5.0
    %v69 = vrcp.pop %v68
    %v70 = vmul.f32 -0.1385711, %v69
    %v71 = vadd.f32 %v53, 6.0
    %v72 = vrcp.pop %v71
    %v73 = vmul.f32 9.984369e-06, %v72
    %v74 = vadd.f32 %v53, 7.0
    %v75 = vrcp.pop %v74
    %v76 = vmul.f32 1.5056327e-07, %v75
    %v77 = vadd.f32 %v55, %v58
    %v78 = vadd.f32 %v61, %v64
    %v79 = vadd.f32 %v67, %v70
    %v80 = vadd.f32 %v73, %v76
    %v81 = vadd.f32 %v77, %v78
    %v82 = vadd.f32 %v79, %v80
    %v83 = vadd.f32 %v81, %v82
    %v84 = vadd.f32 %v83, 1.0
    %v85 = vadd.f32 %v53, 6.5
    %v86 = vsub.f32 %v53, 0.5
    %v87 = vlog2.pop %v85
    %v88 = vmul.f32 %v87, 0.6931472
    %v89 = vmul.f32 %v86, %v88
    %v90 = vadd.f32 %v89, 0.9189385
    %v91 = vsub.f32 %v90, %v85
    %v92 = vlog2.pop %v84
    %v93 = vmul.f32 %v92, 0.6931472
    %v94 = vadd.f32 %v91, %v93
    %vm95 = vcmp.lt.s32.totalorder %v47, 2
    %v96 = vsel %vm48, -1.0, 0.0
    %v97 = vsel %vm95, 1.0, %v96
    %v98 = vmul.f32 %v94, %v97
    %vm99 = vcmask 326656
    %v100 = vsel %vm99, %v98, 0.0
    %v101 = vrot.slane %v100, 4
    %v102 = vadd.f32 %v100, %v101
    %v103 = vrot.slane %v102, 2
    %v104 = vadd.f32 %v102, %v103
    %v105 = vrot.slane %v104, 1
    %v106 = vadd.f32 %v104, %v105
    %s107 = ssub.f32 1.0, %s36
    %v108 = vstv %s107
    %v109 = vmul.f32 %v108, %v37
    %s110 = smul.f32 %s36, 0.5
    %v111 = vstv %s110
    %v112 = vadd.f32 %v109, %v111
    %v113 = vlog2.pop %v112
    %v114 = vmul.f32 %v113, 0.6931472
    %v115 = vsub.f32 1.0, %v112
    %v116 = vlog2.pop %v115
    %v117 = vmul.f32 %v116, 0.6931472
    %v118 = vsub.f32 %v114, %v117
    %v119 = vmul.f32 %v118, %v38
    %v120 = vsub.f32 0.0, %v119
    %v121 = vmax.f32 %v120, 0.0
    %v122 = vand.u32 2147483647, %v119
    %v123 = vsub.f32 0.0, %v122
    %v124 = vmul.f32 %v123, 1.442695
    %v125 = vpow.pop %v124
    %v126 = vadd.f32 %v125, 1.0
    %v127 = vlog2.pop %v126
    %v128 = vmul.f32 %v127, 0.6931472
    %v129 = vadd.f32 %v121, %v128
    %v130 = vsub.f32 0.0, %v129
    %v131 = vsub.f32 %v120, %v129
    %v133 = vrot.slane %v130, 2
    %vm135 = vcmask 324608
    %v136 = vsel %vm135, %v133, 0.0
    %v137 = vrot.slane %v136, 4
    %v138 = vadd.f32 %v136, %v137
    %v139 = vrot.slane %v138, 2
    %v140 = vadd.f32 %v138, %v139
    %v141 = vrot.slane %v140, 1
    %v142 = vadd.f32 %v140, %v141
    %v144 = vrot.slane %v131, 2
    %v146 = vsel %vm135, %v144, 0.0
    %v147 = vrot.slane %v146, 4
    %v148 = vadd.f32 %v146, %v147
    %v149 = vrot.slane %v148, 2
    %v150 = vadd.f32 %v148, %v149
    %v151 = vrot.slane %v150, 1
    %v152 = vadd.f32 %v150, %v151
    %v153 = vsub.f32 %v41, 1.0
    %v154 = vmul.f32 %v153, %v142
    %v155 = vmul.f32 %v153, %v152
    %v157 = vrot.slane %v155, 1
    %v159 = vadd.f32 %v154, %v157
    %v160 = vmul.f32 %v106, 0.025
    %v161 = vmul.f32 %v159, 0.004166667
    %v162 = vsub.f32 %v160, %v161
    %vm163 = vcmask 319488
    %v164 = vsel %vm163, %v162, 0.0
    %165 = vadd.xlane.f32.xlu0 %v164
    %v166 = vpop.xlane.xlu0 %165
    %vm167 = vcmask 0
    %168 = vst.msk [vmem:[#allocation7] sm:$0x1] %vm167, %v166
    // Predicated region
    $region18: #{tpu_custom_call.1} parent=1 // pred_check
      _
    $region19: #{tpu_custom_call.1} parent=1 // pred_check_branch
      %170 = sbr.rel (0) target = $region21
    $region20: #{tpu_custom_call.1} parent=1 // pred_region
      %s172 = ssub.s32 16, 16
      %173 = vsyncadd [#allocation4], %s172
      %s175 = sshll.u32 [#allocation7], 4
      %s176 = int_to_ptr.vmem [resolvable:$true] %s175
      %178 = dma.vmem_to_hbm [thread:$0]  %s176, 16, %s2, [#allocation4]
    $region21: #{tpu_custom_call.1} parent=1 // pred_fallthru
      _
    // Predicated region
    $region22: #{tpu_custom_call.1} parent=1 // pred_check
      _
    $region23: #{tpu_custom_call.1} parent=1 // pred_check_branch
      %180 = sbr.rel (0) target = $region25
    $region24: #{tpu_custom_call.1} parent=1 // pred_region
      %181 = dma.done [#allocation4], 16
    $region25: #{tpu_custom_call.1} parent=1 // pred_fallthru
      _
    %182 = vsyncpa [#allocation3], 1
    %183 = vsyncpa [#allocation4], 1
    %184 = vsyncpa [#allocation5], 1

</llo_original>
